<compile_context>
chip_gen: v7x
topology: tpu7x:2x2x1
jax: 0.10.0
libtpu: 0.0.40
codegen_flags: <defaults>
</compile_context>

<pallas_src>
from functools import partial

import jax
import jax.numpy as jnp
from jax import lax
from jax.experimental import pallas as pl
from jax.experimental.pallas import tpu as pltpu


_VMEM_LIMIT_BYTES = 32 * 1024 * 1024


def _pick_tile_h(ho: int, max_tile: int = 64) -> int:
    """Largest multiple-of-8 divisor of Ho that is <= max_tile and leaves >= 2 tiles
    (so the pipeline has steps to overlap); falls back to the full extent."""
    cap = min(max_tile, max(8, ho // 2))
    best = None
    t = 8
    while t <= cap:
        if ho % t == 0:
            best = t
        t += 8
    return best if best is not None else ho


def _conv_bn_relu_kernel(x_ref, wb_ref, bias_ref, o_ref, *, stride, kh_taps, relu):
    # x_ref:    (1, Hp, W*Cin)         H-padded, lane-dense input, one batch element
    # wb_ref:   (KH, W*Cin, Wo*Cout)   width-banded weights (BN scale folded in)
    # bias_ref: (1, Wo*Cout)           folded BN/conv bias, tiled across Wo
    # o_ref:    (1, tile_h, Wo*Cout)   lane-dense output tile
    tile_h = o_ref.shape[1]
    n_out = o_ref.shape[2]
    k_dim = x_ref.shape[2]

    t = pl.program_id(1)
    row0 = pl.multiple_of(t * (tile_h * stride), tile_h * stride)

    acc = jnp.zeros((tile_h, n_out), jnp.float32)
    for kh in range(kh_taps):  # static, small (= KH)
        if stride == 1:
            rows = x_ref[0, pl.ds(row0 + kh, tile_h), :]
        else:
            span = (tile_h - 1) * stride + 1
            full = x_ref[0, pl.ds(row0 + kh, span), :]
            rows = lax.slice(full, (0, 0), (span, k_dim), (stride, 1))
        acc = acc + jnp.dot(rows, wb_ref[kh], preferred_element_type=jnp.float32)

    y = acc + bias_ref[...]          # (tile_h, Wo*Cout) + (1, Wo*Cout)
    if relu:
        y = jnp.maximum(y, 0.0)
    o_ref[0] = y.astype(o_ref.dtype)


def basic_conv(x_nchw, w_oihw, gamma=None, beta=None, running_mean=None,
               running_var=None, conv_bias=None, *, stride=1, padding=0, eps=1e-5,
               bn=True, relu=True, compute_dtype=None, max_tile_h=64):
    """Fused Conv2d(groups=1, dilation=1) + BatchNorm2d(eval) + ReLU. NCHW in/out."""
    N, Cin, H, W = x_nchw.shape
    Cout, _, KH, KW = w_oihw.shape
    if isinstance(padding, (tuple, list)):
        pad_h, pad_w = padding
    else:
        pad_h = pad_w = padding

    Ho = (H + 2 * pad_h - KH) // stride + 1
    Wo = (W + 2 * pad_w - KW) // stride + 1
    Hp = H + 2 * pad_h
    out_dtype = x_nchw.dtype
    if compute_dtype is None:
        compute_dtype = x_nchw.dtype

    # ---- fold BN (inference) to per-Cout scale/bias; fold the scale into the weights
    if bn:
        scale = (gamma / jnp.sqrt(running_var + eps)).astype(jnp.float32)
        bias = beta.astype(jnp.float32) - running_mean.astype(jnp.float32) * scale
    else:
        scale = jnp.ones((Cout,), jnp.float32)
        bias = jnp.zeros((Cout,), jnp.float32)
    if conv_bias is not None:
        bias = bias + conv_bias.astype(jnp.float32) * scale

    w_hwio = jnp.transpose(w_oihw, (2, 3, 1, 0)).astype(jnp.float32)
    w_hwio = w_hwio * scale[None, None, None, :]                     # (KH, KW, Cin, Cout)

    # ---- width-banded weight operand: absorbs kw taps, W-padding and W-stride.
    w_in = jnp.arange(W)
    w_out = jnp.arange(Wo)
    kw_idx = w_in[:, None] + pad_w - stride * w_out[None, :]         # (W, Wo)
    valid = (kw_idx >= 0) & (kw_idx < KW)
    kw_c = jnp.clip(kw_idx, 0, KW - 1)
    band = jnp.where(valid[None, :, :, None, None],
                     w_hwio[:, kw_c, :, :],                          # (KH, W, Wo, Cin, Cout)
                     0.0)
    wb = jnp.transpose(band, (0, 1, 3, 2, 4)).reshape(KH, W * Cin, Wo * Cout)
    wb = wb.astype(compute_dtype)

    bias_row = jnp.tile(bias, (Wo,)).reshape(1, Wo * Cout)           # f32, lane-dense

    # ---- activations: NCHW -> NHWC, pad H only, flatten (W, Cin) into a dense lane dim
    x = jnp.transpose(x_nchw, (0, 2, 3, 1))
    x = jnp.pad(x, ((0, 0), (pad_h, pad_h), (0, 0), (0, 0)))
    x = x.reshape(N, Hp, W * Cin).astype(compute_dtype)

    tile_h = _pick_tile_h(Ho, max_tile_h)
    grid = (N, Ho // tile_h)
    n_out = Wo * Cout

    kernel = partial(_conv_bn_relu_kernel, stride=stride, kh_taps=KH, relu=relu)

    out = pl.pallas_call(
        kernel,
        out_shape=jax.ShapeDtypeStruct((N, Ho, n_out), out_dtype),
        grid_spec=pltpu.PrefetchScalarGridSpec(
            num_scalar_prefetch=0,
            grid=grid,
            in_specs=[
                # whole padded image per batch element; same block across the Ho-tile
                # axis -> DMA'd once per n, rows sliced from the ref inside the kernel.
                pl.BlockSpec((1, Hp, W * Cin), lambda n, t: (n, 0, 0)),
                # banded weights + bias: constant block index -> stay resident in VMEM.
                pl.BlockSpec((KH, W * Cin, n_out), lambda n, t: (0, 0, 0)),
                pl.BlockSpec((1, n_out), lambda n, t: (0, 0)),
            ],
            out_specs=pl.BlockSpec((1, tile_h, n_out), lambda n, t: (n, t, 0)),
        ),
        compiler_params=pltpu.CompilerParams(
            dimension_semantics=("parallel", "parallel"),
            vmem_limit_bytes=_VMEM_LIMIT_BYTES,
        ),
    )(x, wb, bias_row)

    out = out.reshape(N, Ho, Wo, Cout)          # contiguous reshape (free)
    return jnp.transpose(out, (0, 3, 1, 2))     # NHWC -> NCHW


def _reference(x_nchw, w_oihw, gamma, beta, running_mean, running_var,
               *, stride=1, padding=1, eps=1e-5, bn=True, relu=True):
    y = lax.conv_general_dilated(
        x_nchw, w_oihw,
        window_strides=(stride, stride),
        padding=((padding, padding), (padding, padding)),
        dimension_numbers=("NCHW", "OIHW", "NCHW"),
    )
    if bn:
        scale = gamma / jnp.sqrt(running_var + eps)
        bias = beta - running_mean * scale
        y = y * scale[None, :, None, None] + bias[None, :, None, None]
    if relu:
        y = jnp.maximum(y, 0.0)
    return y


if __name__ == "__main__":
    key = jax.random.PRNGKey(0)
    k_x, k_w, k_g, k_b, k_m, k_v = jax.random.split(key, 6)

    # BasicConv(in_planes=4, out_planes=8, kernel_size=3, stride=1, padding=1)
    N, Cin, H, W = 2, 4, 16, 16
    Cout, KH, KW = 8, 3, 3

    x = jax.random.normal(k_x, (N, Cin, H, W), jnp.float32)
    w = jax.random.normal(k_w, (Cout, Cin, KH, KW), jnp.float32) * 0.1
    gamma = jax.random.normal(k_g, (Cout,), jnp.float32) * 0.1 + 1.0
    beta = jax.random.normal(k_b, (Cout,), jnp.float32) * 0.1
    running_mean = jax.random.normal(k_m, (Cout,), jnp.float32) * 0.1
    running_var = jax.random.uniform(k_v, (Cout,), jnp.float32, 0.5, 1.5)

    ref = _reference(x, w, gamma, beta, running_mean, running_var,
                     stride=1, padding=1, bn=True, relu=True)

    # f32 path
    fwd_f32 = jax.jit(partial(basic_conv, stride=1, padding=1, bn=True, relu=True))
    out = jax.block_until_ready(fwd_f32(x, w, gamma, beta, running_mean, running_var))
    assert out.shape == (N, Cout, H, W), out.shape
    err = float(jnp.max(jnp.abs(out - ref)))
    assert jnp.allclose(out, ref, atol=5e-4, rtol=5e-4), f"f32 mismatch, max abs err {err:e}"

    # bf16 matmul-operand path (v6e/v7x MXU-native dtype; f32 accumulation + epilogue)
    fwd_bf16 = jax.jit(partial(basic_conv, stride=1, padding=1, bn=True, relu=True,
                               compute_dtype=jnp.bfloat16))
    out_bf16 = jax.block_until_ready(
        fwd_bf16(x, w, gamma, beta, running_mean, running_var))
    err_bf16 = float(jnp.max(jnp.abs(out_bf16 - ref)))
    assert jnp.allclose(out_bf16, ref, atol=3e-2, rtol=3e-2), \
        f"bf16 mismatch, max abs err {err_bf16:e}"

    print("KERNEL_OK")
</pallas_src>

<mosaic_0001>
module attributes {stable_mosaic.version = 11 : i64} {
  func.func @_conv_bn_relu_kernel(%arg0: i32, %arg1: i32, %arg2: memref<1x18x64xf32, #tpu.memory_space<vmem>>, %arg3: memref<3x64x128xf32, #tpu.memory_space<vmem>>, %arg4: memref<1x128xf32, #tpu.memory_space<vmem>>, %arg5: memref<1x8x128xf32, #tpu.memory_space<vmem>>) attributes {dimension_semantics = [#tpu.dimension_semantics<parallel>, #tpu.dimension_semantics<parallel>], iteration_bounds = array<i64: 2, 2>, scalar_prefetch = 0 : i64, scratch_operands = 0 : i64, tpu.core_type = #tpu.core_type<tc>, window_params = [{transform_indices = @transform_0, window_bounds = array<i64: 1, 18, 64>}, {pipeline_mode = #tpu.pipeline_mode<synchronous>, transform_indices = @transform_1, window_bounds = array<i64: 3, 64, 128>}, {pipeline_mode = #tpu.pipeline_mode<synchronous>, transform_indices = @transform_2, window_bounds = array<i64: 1, 128>}, {transform_indices = @transform_3, window_bounds = array<i64: 1, 8, 128>}]} {
    %c8_i32 = arith.constant 8 : i32
    %0 = arith.muli %arg1, %c8_i32 : i32
    %1 = tpu.assume_multiple %0, 8 : i32
    %cst = arith.constant 0.000000e+00 : f32
    %2 = vector.broadcast %cst : f32 to vector<8x128xf32>
    %c0_i32 = arith.constant 0 : i32
    %3 = arith.addi %1, %c0_i32 : i32
    %c0 = arith.constant 0 : index
    %4 = arith.index_cast %3 : i32 to index
    %c0_0 = arith.constant 0 : index
    %5 = vector.load %arg2[%c0, %4, %c0_0] : memref<1x18x64xf32, #tpu.memory_space<vmem>>, vector<1x8x64xf32>
    %6 = vector.shape_cast %5 : vector<1x8x64xf32> to vector<8x64xf32>
    %c0_1 = arith.constant 0 : index
    %c0_2 = arith.constant 0 : index
    %c0_3 = arith.constant 0 : index
    %7 = vector.load %arg3[%c0_1, %c0_2, %c0_3] : memref<3x64x128xf32, #tpu.memory_space<vmem>>, vector<1x64x128xf32>
    %8 = vector.shape_cast %7 : vector<1x64x128xf32> to vector<64x128xf32>
    %cst_4 = arith.constant dense<0.000000e+00> : vector<8x128xf32>
    %9 = tpu.matmul %6, %8, %cst_4 {dimension_numbers = #tpu.dot_dimension_numbers<[1], [0], [0], [1], [0, 0, 1, 1], [], []>} : vector<8x64xf32>, vector<64x128xf32>, vector<8x128xf32> -> vector<8x128xf32>
    %10 = arith.addf %2, %9 : vector<8x128xf32>
    %c1_i32 = arith.constant 1 : i32
    %11 = arith.addi %1, %c1_i32 : i32
    %c0_5 = arith.constant 0 : index
    %12 = arith.index_cast %11 : i32 to index
    %c0_6 = arith.constant 0 : index
    %13 = vector.load %arg2[%c0_5, %12, %c0_6] : memref<1x18x64xf32, #tpu.memory_space<vmem>>, vector<1x8x64xf32>
    %14 = vector.shape_cast %13 : vector<1x8x64xf32> to vector<8x64xf32>
    %c1 = arith.constant 1 : index
    %c0_7 = arith.constant 0 : index
    %c0_8 = arith.constant 0 : index
    %15 = vector.load %arg3[%c1, %c0_7, %c0_8] : memref<3x64x128xf32, #tpu.memory_space<vmem>>, vector<1x64x128xf32>
    %16 = vector.shape_cast %15 : vector<1x64x128xf32> to vector<64x128xf32>
    %cst_9 = arith.constant dense<0.000000e+00> : vector<8x128xf32>
    %17 = tpu.matmul %14, %16, %cst_9 {dimension_numbers = #tpu.dot_dimension_numbers<[1], [0], [0], [1], [0, 0, 1, 1], [], []>} : vector<8x64xf32>, vector<64x128xf32>, vector<8x128xf32> -> vector<8x128xf32>
    %18 = arith.addf %10, %17 : vector<8x128xf32>
    %c2_i32 = arith.constant 2 : i32
    %19 = arith.addi %1, %c2_i32 : i32
    %c0_10 = arith.constant 0 : index
    %20 = arith.index_cast %19 : i32 to index
    %c0_11 = arith.constant 0 : index
    %21 = vector.load %arg2[%c0_10, %20, %c0_11] : memref<1x18x64xf32, #tpu.memory_space<vmem>>, vector<1x8x64xf32>
    %22 = vector.shape_cast %21 : vector<1x8x64xf32> to vector<8x64xf32>
    %c2 = arith.constant 2 : index
    %c0_12 = arith.constant 0 : index
    %c0_13 = arith.constant 0 : index
    %23 = vector.load %arg3[%c2, %c0_12, %c0_13] : memref<3x64x128xf32, #tpu.memory_space<vmem>>, vector<1x64x128xf32>
    %24 = vector.shape_cast %23 : vector<1x64x128xf32> to vector<64x128xf32>
    %cst_14 = arith.constant dense<0.000000e+00> : vector<8x128xf32>
    %25 = tpu.matmul %22, %24, %cst_14 {dimension_numbers = #tpu.dot_dimension_numbers<[1], [0], [0], [1], [0, 0, 1, 1], [], []>} : vector<8x64xf32>, vector<64x128xf32>, vector<8x128xf32> -> vector<8x128xf32>
    %26 = arith.addf %18, %25 : vector<8x128xf32>
    %c0_15 = arith.constant 0 : index
    %c0_16 = arith.constant 0 : index
    %27 = vector.load %arg4[%c0_15, %c0_16] : memref<1x128xf32, #tpu.memory_space<vmem>>, vector<1x128xf32>
    %28 = vector.broadcast %27 : vector<1x128xf32> to vector<8x128xf32>
    %29 = arith.addf %26, %28 : vector<8x128xf32>
    %cst_17 = arith.constant 0.000000e+00 : f32
    %30 = vector.broadcast %cst_17 : f32 to vector<8x128xf32>
    %31 = arith.maximumf %29, %30 : vector<8x128xf32>
    %c0_18 = arith.constant 0 : index
    %c0_19 = arith.constant 0 : index
    %c0_20 = arith.constant 0 : index
    %32 = vector.load %arg5[%c0_18, %c0_19, %c0_20] : memref<1x8x128xf32, #tpu.memory_space<vmem>>, vector<1x8x128xf32>
    %33 = vector.shape_cast %32 : vector<1x8x128xf32> to vector<8x128xf32>
    %34 = vector.shape_cast %31 : vector<8x128xf32> to vector<1x8x128xf32>
    tpu.vector_store %arg5[%c0_18, %c0_19, %c0_20], %34 {strides = array<i32>} : memref<1x8x128xf32, #tpu.memory_space<vmem>>, vector<1x8x128xf32>,
    return
  }
  func.func @transform_0(%arg0: i32, %arg1: i32) -> (i32, i32, i32) {
    %c0_i32 = arith.constant 0 : i32
    %c0_i32_0 = arith.constant 0 : i32
    %c0_i32_1 = arith.constant 0 : i32
    return %arg0, %c0_i32, %c0_i32_0 : i32, i32, i32
  }
  func.func @transform_1(%arg0: i32, %arg1: i32) -> (i32, i32, i32) {
    %c0_i32 = arith.constant 0 : i32
    %c0_i32_0 = arith.constant 0 : i32
    %c0_i32_1 = arith.constant 0 : i32
    %c0_i32_2 = arith.constant 0 : i32
    return %c0_i32, %c0_i32_0, %c0_i32_1 : i32, i32, i32
  }
  func.func @transform_2(%arg0: i32, %arg1: i32) -> (i32, i32) {
    %c0_i32 = arith.constant 0 : i32
    %c0_i32_0 = arith.constant 0 : i32
    %c0_i32_1 = arith.constant 0 : i32
    return %c0_i32, %c0_i32_0 : i32, i32
  }
  func.func @transform_3(%arg0: i32, %arg1: i32) -> (i32, i32, i32) {
    %c0_i32 = arith.constant 0 : i32
    %c0_i32_0 = arith.constant 0 : i32
    return %arg0, %arg1, %c0_i32 : i32, i32, i32
  }
}

</mosaic_0001>

<llo_original>
// kernel: tile.8
$region0: #{tile.8}
  #allocation0 [shape = 's32[1]{0}', space=sflag, size = 0x4, scoped, tag = 'scoped memory for tile.8']
  %s0 = inlined_call_operand.vmem [shape: f32[8], index: 0, kind: input, shape index: {}]
  %s1 = inlined_call_operand.vmem [shape: f32[16,8], index: 1, kind: output, shape index: {}]
  // Predicated region
  $region2: #{tile.8} parent=0 // pred_check
    _
  $region3: #{tile.8} parent=0 // pred_check_branch
    %3 = sbr.rel (0) target = $region5
  $region4: #{tile.8} parent=0 // pred_region
    _
  $region5: #{tile.8} parent=0 // pred_fallthru
    _
  %v4 = vld [vmem:[%s0] ss:$0 sm:$0xff]
  %5 = vst [vmem:[%s1] sm:$0xff] %v4
  %s6 = scalar_lea.vmem %s1, 8
  %7 = vst [vmem:[%s6] sm:$0xff] %v4

// kernel: tile.9
$region0: #{tile.9}
  %s0 = inlined_call_operand.vmem [shape: f32[16,8], index: 0, kind: input, shape index: {}]
  %s1 = inlined_call_operand.vmem [shape: f32[1,128], index: 1, kind: output, shape index: {}]
  $region1: #{tile.9} parent=0
    #allocation0 [shape = 'u8[4096]{0}', space=vmem, size = 0x1000, scoped, tag = 'scoped mem for output reshape']
    %v2 = vld [vmem:[%s0] sm:$0x1]
    %vm3 = vcmask 64512
    %4 = vst.msk [vmem:[#allocation0] sm:$0x1] %vm3, %v2
    %s5 = scalar_lea.vmem %s0, 15
    %v6 = vld [vmem:[%s5] sm:$0x1]
    %7 = vrot.lane.b32.xlu0 %v6, 120
    %v8 = vpop.permute.xlu0 %7
    %vm9 = vcmask 1048512
    %10 = vst.msk [vmem:[#allocation0] sm:$0x1] %vm9, %v8
    %s11 = scalar_lea.vmem %s0, 14
    %v12 = vld [vmem:[%s11] sm:$0x1]
    %13 = vrot.lane.b32.xlu0 %v12, 112
    %v14 = vpop.permute.xlu0 %13
    %vm15 = vcmask 982912
    %16 = vst.msk [vmem:[#allocation0] sm:$0x1] %vm15, %v14
    %s17 = scalar_lea.vmem %s0, 13
    %v18 = vld [vmem:[%s17] sm:$0x1]
    %19 = vrot.lane.b32.xlu0 %v18, 104
    %v20 = vpop.permute.xlu0 %19
    %vm21 = vcmask 917312
    %22 = vst.msk [vmem:[#allocation0] sm:$0x1] %vm21, %v20
    %s23 = scalar_lea.vmem %s0, 12
    %v24 = vld [vmem:[%s23] sm:$0x1]
    %25 = vrot.lane.b32.xlu0 %v24, 96
    %v26 = vpop.permute.xlu0 %25
    %vm27 = vcmask 851712
    %28 = vst.msk [vmem:[#allocation0] sm:$0x1] %vm27, %v26
    %s29 = scalar_lea.vmem %s0, 11
    %v30 = vld [vmem:[%s29] sm:$0x1]
    %31 = vrot.lane.b32.xlu0 %v30, 88
    %v32 = vpop.permute.xlu0 %31
    %vm33 = vcmask 786112
    %34 = vst.msk [vmem:[#allocation0] sm:$0x1] %vm33, %v32
    %s35 = scalar_lea.vmem %s0, 10
    %v36 = vld [vmem:[%s35] sm:$0x1]
    %37 = vrot.lane.b32.xlu0 %v36, 80
    %v38 = vpop.permute.xlu0 %37
    %vm39 = vcmask 720512
    %40 = vst.msk [vmem:[#allocation0] sm:$0x1] %vm39, %v38
    %s41 = scalar_lea.vmem %s0, 9
    %v42 = vld [vmem:[%s41] sm:$0x1]
    %43 = vrot.lane.b32.xlu0 %v42, 72
    %v44 = vpop.permute.xlu0 %43
    %vm45 = vcmask 654912
    %46 = vst.msk [vmem:[#allocation0] sm:$0x1] %vm45, %v44
    %s47 = scalar_lea.vmem %s0, 8
    %v48 = vld [vmem:[%s47] sm:$0x1]
    %49 = vrot.lane.b32.xlu0 %v48, 64
    %v50 = vpop.permute.xlu0 %49
    %vm51 = vcmask 589312
    %52 = vst.msk [vmem:[#allocation0] sm:$0x1] %vm51, %v50
    %s53 = scalar_lea.vmem %s0, 7
    %v54 = vld [vmem:[%s53] sm:$0x1]
    %55 = vrot.lane.b32.xlu0 %v54, 56
    %v56 = vpop.permute.xlu0 %55
    %vm57 = vcmask 523712
    %58 = vst.msk [vmem:[#allocation0] sm:$0x1] %vm57, %v56
    %s59 = scalar_lea.vmem %s0, 6
    %v60 = vld [vmem:[%s59] sm:$0x1]
    %61 = vrot.lane.b32.xlu0 %v60, 48
    %v62 = vpop.permute.xlu0 %61
    %vm63 = vcmask 458112
    %64 = vst.msk [vmem:[#allocation0] sm:$0x1] %vm63, %v62
    %s65 = scalar_lea.vmem %s0, 5
    %v66 = vld [vmem:[%s65] sm:$0x1]
    %67 = vrot.lane.b32.xlu0 %v66, 40
    %v68 = vpop.permute.xlu0 %67
    %vm69 = vcmask 392512
    %70 = vst.msk [vmem:[#allocation0] sm:$0x1] %vm69, %v68
    %s71 = scalar_lea.vmem %s0, 4
    %v72 = vld [vmem:[%s71] sm:$0x1]
    %73 = vrot.lane.b32.xlu0 %v72, 32
    %v74 = vpop.permute.xlu0 %73
    %vm75 = vcmask 326912
    %76 = vst.msk [vmem:[#allocation0] sm:$0x1] %vm75, %v74
    %s77 = scalar_lea.vmem %s0, 3
    %v78 = vld [vmem:[%s77] sm:$0x1]
    %79 = vrot.lane.b32.xlu0 %v78, 24
    %v80 = vpop.permute.xlu0 %79
    %vm81 = vcmask 261312
    %82 = vst.msk [vmem:[#allocation0] sm:$0x1] %vm81, %v80
    %s83 = scalar_lea.vmem %s0, 2
    %v84 = vld [vmem:[%s83] sm:$0x1]
    %85 = vrot.lane.b32.xlu0 %v84, 16
    %v86 = vpop.permute.xlu0 %85
    %vm87 = vcmask 195712
    %88 = vst.msk [vmem:[#allocation0] sm:$0x1] %vm87, %v86
    %s89 = scalar_lea.vmem %s0, 1
    %v90 = vld [vmem:[%s89] sm:$0x1]
    %91 = vrot.lane.b32.xlu0 %v90, 8
    %v92 = vpop.permute.xlu0 %91
    %vm93 = vcmask 130112
    %94 = vst.msk [vmem:[#allocation0] sm:$0x1] %vm93, %v92
    %s96 = sshllo.u32 0, 1
    %v98 = vld [vmem:[#allocation0] sm:%s96]
    %s99 = sshllo.u32 0, 1
    %100 = vst [vmem:[%s1] sm:%s99] %v98

// kernel: basic_conv.1
$region0: #{basic_conv.1}
  #allocation0 [shape = 'u32[]', space=smem, size = 0x4, offset = 0x4, fixed_abs, tag = 'smem constant byte address 0x4 - core index']
  #allocation1 [shape = 'u32[144,128]{1,0:T(1,128)}', space=vmem, size = 0x12000, scoped, tag = 'internal scratch']
  %s0 = inlined_call_operand.vmem [shape: f32[2,18,64], index: 0, kind: input, shape index: {}]
  %s1 = inlined_call_operand.vmem [shape: f32[3,64,128], index: 1, kind: input, shape index: {}]
  %s2 = inlined_call_operand.vmem [shape: f32[1,128], index: 2, kind: input, shape index: {}]
  %s3 = inlined_call_operand.vmem [shape: f32[2,16,128], index: 3, kind: output, shape index: {}]
  %s4 = sld [smem:[#allocation0]]
  $region45: #{basic_conv.1} parent=0
    _
  %s6 = ssub.s32 1, %s4
  %s7 = scalar_select 0, %s6, %s4
  loop: start=0, step=1, limit=6
  $region2: #{basic_conv.1} parent=0 // loop_pre_header
    _
  $region3: #{basic_conv.1} parent=0 // loop_header
    %s9 = sphi 0, %s13
    %p10 = scmp.ge.s32.totalorder %s9, 6
    %s16 = sphi 0, %s28
    %s17 = sphi 0, %s24
    %s18 = sphi 0, %s16
    %s19 = sphi 0, %s17
    %s20 = sphi 0, %s18
    %s21 = sphi 0, %s19
    %s31 = sphi 0, %s33
    %s34 = sphi 0, %s31
    %s35 = sphi 0, %s34
    %s51 = sphi 0, %s35
    %s55 = sphi 0, %s55
    %s57 = sphi 0, %s55
    %s58 = sphi 0, %s57
    %s72 = sphi 0, %s58
    %s76 = sphi 0, %s76
    %s78 = sphi 0, %s76
    %s79 = sphi 0, %s78
    %s93 = sphi 0, %s79
    %s101 = sphi 0, %s103
    %s104 = sphi 0, %s101
    %s105 = sphi 0, %s104
    %s121 = sphi 0, %s105
  $region4: #{basic_conv.1} parent=0 // loop_header_branch
    %12 = sbr.rel (%p10) target = $region8
  $region5: #{basic_conv.1} parent=0 // loop_body
    %s14 = ssub.s32 %s9, 1
    %s15 = ssub.s32 %s9, 2
    %s22 = sadd.s32 1, %s17
    %p23 = scmp.ge.s32.totalorder %s22, 2
    %s24 = scalar_select %p23, 0, %s22
    %s25 = sadd.s32 1, %s16
    %s26 = scalar_select %p23, %s25, %s16
    %p27 = scmp.ge.s32.totalorder %s26, 2
    %s28 = scalar_select %p27, 0, %s26
    %s29 = ssub.s32 %s16, %s28
    %p30 = scmp.eq.s32.totalorder %s29, 0
    %s32 = sadd.s32 %s31, 1
    %s33 = scalar_select %p30, %s31, %s32
    %p36 = pneg %p30
    %p37 = scmp.eq.s32.totalorder %s9, 3
    %p38 = por %p36, %p37
    %p39 = scmp.ne.s32.totalorder %s31, %s34
    %p40 = scmp.eq.s32.totalorder %s9, 0
    %p41 = por %p39, %p40
    %p42 = scmp.ne.s32.totalorder %s31, %s34
    %p43 = scmp.eq.s32.totalorder %s14, 3
    %p44 = por %p42, %p43
    %p45 = scmp.ne.s32.totalorder %s34, %s35
    %p46 = scmp.eq.s32.totalorder %s14, 0
    %p47 = por %p45, %p46
    %p48 = scmp.ne.s32.totalorder %s34, %s35
    %p49 = scmp.eq.s32.totalorder %s15, 3
    %p50 = por %p48, %p49
    %p52 = scmp.ne.s32.totalorder %s35, %s51
    %p53 = scmp.eq.s32.totalorder %s15, 0
    %p54 = por %p52, %p53
    %s56 = sadd.s32 %s55, 1
    %p59 = scmp.eq.s32.totalorder %s9, 3
    %p60 = scmp.ne.s32.totalorder %s55, %s57
    %p61 = scmp.eq.s32.totalorder %s9, 0
    %p62 = por %p60, %p61
    %p63 = scmp.ne.s32.totalorder %s55, %s57
    %p64 = scmp.eq.s32.totalorder %s14, 3
    %p65 = por %p63, %p64
    %p66 = scmp.ne.s32.totalorder %s57, %s58
    %p67 = scmp.eq.s32.totalorder %s14, 0
    %p68 = por %p66, %p67
    %p69 = scmp.ne.s32.totalorder %s57, %s58
    %p70 = scmp.eq.s32.totalorder %s15, 3
    %p71 = por %p69, %p70
    %p73 = scmp.ne.s32.totalorder %s58, %s72
    %p74 = scmp.eq.s32.totalorder %s15, 0
    %p75 = por %p73, %p74
    %s77 = sadd.s32 %s76, 1
    %p80 = scmp.eq.s32.totalorder %s9, 3
    %p81 = scmp.ne.s32.totalorder %s76, %s78
    %p82 = scmp.eq.s32.totalorder %s9, 0
    %p83 = por %p81, %p82
    %p84 = scmp.ne.s32.totalorder %s76, %s78
    %p85 = scmp.eq.s32.totalorder %s14, 3
    %p86 = por %p84, %p85
    %p87 = scmp.ne.s32.totalorder %s78, %s79
    %p88 = scmp.eq.s32.totalorder %s14, 0
    %p89 = por %p87, %p88
    %p90 = scmp.ne.s32.totalorder %s78, %s79
    %p91 = scmp.eq.s32.totalorder %s15, 3
    %p92 = por %p90, %p91
    %p94 = scmp.ne.s32.totalorder %s79, %s93
    %p95 = scmp.eq.s32.totalorder %s15, 0
    %p96 = por %p94, %p95
    %s97 = ssub.s32 %s16, %s28
    %s98 = ssub.s32 %s17, %s24
    %s99 = sor.u32 %s97, %s98
    %p100 = scmp.eq.s32.totalorder %s99, 0
    %s102 = sadd.s32 %s101, 1
    %s103 = scalar_select %p100, %s101, %s102
    %p106 = pneg %p100
    %p107 = scmp.eq.s32.totalorder %s9, 3
    %p108 = por %p106, %p107
    %p109 = scmp.ne.s32.totalorder %s101, %s104
    %p110 = scmp.eq.s32.totalorder %s9, 0
    %p111 = por %p109, %p110
    %p112 = scmp.ne.s32.totalorder %s101, %s104
    %p113 = scmp.eq.s32.totalorder %s14, 3
    %p114 = por %p112, %p113
    %p115 = scmp.ne.s32.totalorder %s104, %s105
    %p116 = scmp.eq.s32.totalorder %s14, 0
    %p117 = por %p115, %p116
    %p118 = scmp.ne.s32.totalorder %s104, %s105
    %p119 = scmp.eq.s32.totalorder %s15, 3
    %p120 = por %p118, %p119
    %p122 = scmp.ne.s32.totalorder %s105, %s121
    %p123 = scmp.eq.s32.totalorder %s15, 0
    %p124 = por %p122, %p123
    %p125 = scmp.le.s32.totalorder 1, %s9
    %p126 = scmp.lt.s32.totalorder %s9, 5
    %p127 = pnand %p125, %p126
    %p128 = pneg %p127
    // Predicated region
    $region9: #{basic_conv.1} parent=5 // pred_check
      _
    $region10: #{basic_conv.1} parent=5 // pred_check_branch
      %130 = sbr.rel (%p127) target = $region12
    $region11: #{basic_conv.1} parent=5 // pred_region
      %s131 = ssub.s32 %s9, 1
      // Predicated region
      $region13: #{basic_conv.1} parent=11 // pred_check
        %p132 = pneg %p68
      $region14: #{basic_conv.1} parent=11 // pred_check_branch
        %134 = sbr.rel (%p132) target = $region16
      $region15: #{basic_conv.1} parent=11 // pred_region
        _
      $region16: #{basic_conv.1} parent=11 // pred_fallthru
        _
      // Predicated region
      $region17: #{basic_conv.1} parent=11 // pred_check
        %p135 = pneg %p89
      $region18: #{basic_conv.1} parent=11 // pred_check_branch
        %137 = sbr.rel (%p135) target = $region20
      $region19: #{basic_conv.1} parent=11 // pred_region
        _
      $region20: #{basic_conv.1} parent=11 // pred_fallthru
        _
    $region12: #{basic_conv.1} parent=5 // pred_fallthru
      _
    %p138 = scmp.lt.s32.totalorder %s9, 4
    // Predicated region
    $region21: #{basic_conv.1} parent=5 // pred_check
      %p139 = pneg %p138
    $region22: #{basic_conv.1} parent=5 // pred_check_branch
      %141 = sbr.rel (%p139) target = $region24
    $region23: #{basic_conv.1} parent=5 // pred_region
      // Predicated region
      $region25: #{basic_conv.1} parent=23 // pred_check
        %p142 = pneg %p41
      $region26: #{basic_conv.1} parent=23 // pred_check_branch
        %144 = sbr.rel (%p142) target = $region28
      $region27: #{basic_conv.1} parent=23 // pred_region
        %p145 = scmp.lt.s32.totalorder %s16, 1
        %s146 = scalar_select %p145, %s16, 1
        %s147 = smul.addr %s146, 3
        %s148 = smul.addr %s147, 8
        %s149 = scalar_lea.vmem %s0, %s148
      $region28: #{basic_conv.1} parent=23 // pred_fallthru
        _
    $region24: #{basic_conv.1} parent=5 // pred_fallthru
      _
    %p150 = scmp.le.s32.totalorder 1, %s9
    %p151 = scmp.lt.s32.totalorder %s9, 5
    %p152 = pnand %p150, %p151
    %p153 = pneg %p152
    // Predicated region
    $region29: #{basic_conv.1} parent=5 // pred_check
      _
    $region30: #{basic_conv.1} parent=5 // pred_check_branch
      %155 = sbr.rel (%p152) target = $region32
    $region31: #{basic_conv.1} parent=5 // pred_region
      %s156 = ssub.s32 %s9, 1
      %p157 = scmp.lt.s32.totalorder %s18, 1
      %s158 = scalar_select %p157, %s18, 1
      %s159 = smul.addr %s158, 3
      %s160 = smul.addr %s159, 8
      %s161 = scalar_lea.vmem %s0, %s160
      %p162 = pneg %p47
      %p163 = pneg %p44
      %p164 = pneg %p68
      %p165 = pneg %p65
      %p166 = pneg %p89
      %p167 = pneg %p86
      %p168 = pneg %p117
      %p169 = pneg %p114
      %p170 = scmp.lt.s32.totalorder %s18, 1
      %s171 = scalar_select %p170, %s18, 1
      %p172 = scmp.lt.s32.totalorder %s19, 1
      %s173 = scalar_select %p172, %s19, 1
      %s174 = smul.addr %s171, 2
      %s175 = sadd.s32 %s173, %s174
      %s176 = smul.addr %s175, 8
      %s177 = scalar_lea.vmem %s3, %s176
      %p178 = scmp.lt.s32.totalorder %s18, 1
      %s179 = scalar_select %p178, %s18, 1
      %s180 = smul.addr %s179, 3
      %s181 = smul.addr %s180, 8
      %s182 = scalar_lea.vmem %s0, %s181
      %p183 = scmp.lt.s32.totalorder %s18, 1
      %s184 = scalar_select %p183, %s18, 1
      %p185 = scmp.lt.s32.totalorder %s19, 1
      %s186 = scalar_select %p185, %s19, 1
      %s187 = smul.addr %s184, 2
      %s188 = sadd.s32 %s186, %s187
      %s189 = smul.addr %s188, 8
      %s190 = scalar_lea.vmem %s3, %s189
      %s191 = smul.u32 %s19, 8
      %s192 = scalar_lea.vmem %s182, %s191
      %v193 = vld [vmem:[%s192] sm:$0xff]
      %v194 = vld [vmem:[%s1] sm:$0xff]
      %v195 = vld [vmem:[%s1 + $0x8] sm:$0xff]
      %v196 = vld [vmem:[%s1 + $0x10] sm:$0xff]
      %v197 = vld [vmem:[%s1 + $0x18] sm:$0xff]
      %v198 = vld [vmem:[%s1 + $0x20] sm:$0xff]
      %v199 = vld [vmem:[%s1 + $0x28] sm:$0xff]
      %v200 = vld [vmem:[%s1 + $0x30] sm:$0xff]
      %v201 = vld [vmem:[%s1 + $0x38] sm:$0xff]
      %s202 = sadd.s32 %s191, 1
      %s203 = scalar_lea.vmem %s182, %s202
      %v204 = vld [vmem:[%s203] sm:$0xff]
      %s205 = scalar_lea.vmem %s1, 64
      %v206 = vld [vmem:[%s205] sm:$0xff]
      %v207 = vld [vmem:[%s205 + $0x8] sm:$0xff]
      %v208 = vld [vmem:[%s205 + $0x10] sm:$0xff]
      %v209 = vld [vmem:[%s205 + $0x18] sm:$0xff]
      %v210 = vld [vmem:[%s205 + $0x20] sm:$0xff]
      %v211 = vld [vmem:[%s205 + $0x28] sm:$0xff]
      %v212 = vld [vmem:[%s205 + $0x30] sm:$0xff]
      %v213 = vld [vmem:[%s205 + $0x38] sm:$0xff]
      %vm214 = vcmask 523264
      %v216 = vsel %vm214, %v204, 0
      %218 = vmatprep.subr.mxu0 0.0
      %219 = vmatpush1.msra.mxu0 %v206
      %220 = vmatprep.subr.mxu0 0.0
      %221 = vmatpush1.msra.mxu0 %v207
      %222 = vmatprep.subr.mxu0 0.0
      %223 = vmatpush1.msra.mxu0 %v208
      %224 = vmatprep.subr.mxu0 0.0
      %225 = vmatpush1.msra.mxu0 %v209
      %226 = vmatprep.subr.mxu0 0.0
      %227 = vmatpush1.msra.mxu0 %v210
      %228 = vmatprep.subr.mxu0 0.0
      %229 = vmatpush1.msra.mxu0 %v211
      %230 = vmatprep.subr.mxu0 0.0
      %231 = vmatpush1.msra.mxu0 %v212
      %232 = vmatprep.subr.mxu0 0.0
      %233 = vmatpush1.msra.mxu0 %v213
      %234 = vmatprep.subr.mxu0 0.0
      %235 = vmatpush1.msra.mxu0 0.0
      %236 = vmatprep.subr.mxu0 0.0
      %237 = vmatpush1.msra.mxu0 0.0
      %238 = vmatprep.subr.mxu0 0.0
      %239 = vmatpush1.msra.mxu0 0.0
      %240 = vmatprep.subr.mxu0 0.0
      %241 = vmatpush1.msra.mxu0 0.0
      %242 = vmatprep.subr.mxu0 0.0
      %243 = vmatpush1.msra.mxu0 0.0
      %244 = vmatprep.subr.mxu0 0.0
      %245 = vmatpush1.msra.mxu0 0.0
      %246 = vmatprep.subr.mxu0 0.0
      %247 = vmatpush1.msra.mxu0 0.0
      %248 = vmatprep.subr.mxu0 0.0
      %249 = vmatpush1.msra.mxu0 0.0
      %250 = vmatprep.subr.mxu0 0.0
      %251 = vmatpush1.msra.mxu0 0.0
      %252 = vmatprep.subr.mxu0 0.0
      %253 = vmatpush1.msra.mxu0 0.0
      %254 = vmatprep.subr.mxu0 0.0
      %255 = vmatpush1.msra.mxu0 0.0
      %256 = vmatprep.subr.mxu0 0.0
      %257 = vmatpush1.msra.mxu0 0.0
      %258 = vmatprep.subr.mxu0 0.0
      %259 = vmatpush1.msra.mxu0 0.0
      %260 = vmatprep.subr.mxu0 0.0
      %261 = vmatpush1.msra.mxu0 0.0
      %262 = vmatprep.subr.mxu0 0.0
      %263 = vmatpush1.msra.mxu0 0.0
      %264 = vmatprep.subr.mxu0 0.0
      %265 = vmatpush1.msra.mxu0 0.0
      %266 = vmatprep.subr.mxu0 0.0
      %267 = vmatpush1.msra.mxu0 0.0
      %268 = vmatprep.subr.mxu0 0.0
      %269 = vmatpush1.msra.mxu0 0.0
      %270 = vmatprep.subr.mxu0 0.0
      %271 = vmatpush1.msra.mxu0 0.0
      %272 = vmatprep.subr.mxu0 0.0
      %273 = vmatpush1.msra.mxu0 0.0
      %274 = vmatprep.subr.mxu0 0.0
      %275 = vmatpush1.msra.mxu0 0.0
      %276 = vmatprep.subr.mxu0 0.0
      %277 = vmatpush1.msra.mxu0 0.0
      %278 = vmatprep.subr.mxu0 0.0
      %279 = vmatpush1.msra.mxu0 0.0
      %280 = vmatprep.subr.mxu0 0.0
      %281 = vmatpush1.msra.mxu0 0.0
      %282 = vmatprep.mubr.f32.mxu0 0.0
      %283 = vmatmul.mubr.f32.gmra.mrb[0].mxu0 %v216
      %v284 = vpop.f32.mrb[0].mxu0
      %v285 = vadd.f32 0.0, %v284
      %v286 = vpop.f32.mrb[0].mxu0
      %287 = vdwg.mxu0
      %v289 = vsel %vm214, %v193, 0
      %291 = vmatprep.subr.mxu0 0.0
      %292 = vmatpush1.msra.mxu0 %v194
      %293 = vmatprep.subr.mxu0 0.0
      %294 = vmatpush1.msra.mxu0 %v195
      %295 = vmatprep.subr.mxu0 0.0
      %296 = vmatpush1.msra.mxu0 %v196
      %297 = vmatprep.subr.mxu0 0.0
      %298 = vmatpush1.msra.mxu0 %v197
      %299 = vmatprep.subr.mxu0 0.0
      %300 = vmatpush1.msra.mxu0 %v198
      %301 = vmatprep.subr.mxu0 0.0
      %302 = vmatpush1.msra.mxu0 %v199
      %303 = vmatprep.subr.mxu0 0.0
      %304 = vmatpush1.msra.mxu0 %v200
      %305 = vmatprep.subr.mxu0 0.0
      %306 = vmatpush1.msra.mxu0 %v201
      %307 = vmatprep.subr.mxu0 0.0
      %308 = vmatpush1.msra.mxu0 0.0
      %309 = vmatprep.subr.mxu0 0.0
      %310 = vmatpush1.msra.mxu0 0.0
      %311 = vmatprep.subr.mxu0 0.0
      %312 = vmatpush1.msra.mxu0 0.0
      %313 = vmatprep.subr.mxu0 0.0
      %314 = vmatpush1.msra.mxu0 0.0
      %315 = vmatprep.subr.mxu0 0.0
      %316 = vmatpush1.msra.mxu0 0.0
      %317 = vmatprep.subr.mxu0 0.0
      %318 = vmatpush1.msra.mxu0 0.0
      %319 = vmatprep.subr.mxu0 0.0
      %320 = vmatpush1.msra.mxu0 0.0
      %321 = vmatprep.subr.mxu0 0.0
      %322 = vmatpush1.msra.mxu0 0.0
      %323 = vmatprep.subr.mxu0 0.0
      %324 = vmatpush1.msra.mxu0 0.0
      %325 = vmatprep.subr.mxu0 0.0
      %326 = vmatpush1.msra.mxu0 0.0
      %327 = vmatprep.subr.mxu0 0.0
      %328 = vmatpush1.msra.mxu0 0.0
      %329 = vmatprep.subr.mxu0 0.0
      %330 = vmatpush1.msra.mxu0 0.0
      %331 = vmatprep.subr.mxu0 0.0
      %332 = vmatpush1.msra.mxu0 0.0
      %333 = vmatprep.subr.mxu0 0.0
      %334 = vmatpush1.msra.mxu0 0.0
      %335 = vmatprep.subr.mxu0 0.0
      %336 = vmatpush1.msra.mxu0 0.0
      %337 = vmatprep.subr.mxu0 0.0
      %338 = vmatpush1.msra.mxu0 0.0
      %339 = vmatprep.subr.mxu0 0.0
      %340 = vmatpush1.msra.mxu0 0.0
      %341 = vmatprep.subr.mxu0 0.0
      %342 = vmatpush1.msra.mxu0 0.0
      %343 = vmatprep.subr.mxu0 0.0
      %344 = vmatpush1.msra.mxu0 0.0
      %345 = vmatprep.subr.mxu0 0.0
      %346 = vmatpush1.msra.mxu0 0.0
      %347 = vmatprep.subr.mxu0 0.0
      %348 = vmatpush1.msra.mxu0 0.0
      %349 = vmatprep.subr.mxu0 0.0
      %350 = vmatpush1.msra.mxu0 0.0
      %351 = vmatprep.subr.mxu0 0.0
      %352 = vmatpush1.msra.mxu0 0.0
      %353 = vmatprep.subr.mxu0 0.0
      %354 = vmatpush1.msra.mxu0 0.0
      %355 = vmatprep.mubr.f32.mxu0 0.0
      %356 = vmatmul.mubr.f32.gmra.mrb[0].mxu0 %v289
      %v357 = vpop.f32.mrb[0].mxu0
      %v358 = vadd.f32 %v285, %v357
      %v359 = vpop.f32.mrb[0].mxu0
      %360 = vdwg.mxu0
      %s361 = sadd.s32 %s191, 2
      %s362 = scalar_lea.vmem %s182, %s361
      %v363 = vld [vmem:[%s362] sm:$0xff]
      %s364 = scalar_lea.vmem %s1, 128
      %v365 = vld [vmem:[%s364] sm:$0xff]
      %v366 = vld [vmem:[%s364 + $0x8] sm:$0xff]
      %v367 = vld [vmem:[%s364 + $0x10] sm:$0xff]
      %v368 = vld [vmem:[%s364 + $0x18] sm:$0xff]
      %v369 = vld [vmem:[%s364 + $0x20] sm:$0xff]
      %v370 = vld [vmem:[%s364 + $0x28] sm:$0xff]
      %v371 = vld [vmem:[%s364 + $0x30] sm:$0xff]
      %v372 = vld [vmem:[%s364 + $0x38] sm:$0xff]
      %v374 = vsel %vm214, %v363, 0
      %376 = vmatprep.subr.mxu0 0.0
      %377 = vmatpush1.msra.mxu0 %v365
      %378 = vmatprep.subr.mxu0 0.0
      %379 = vmatpush1.msra.mxu0 %v366
      %380 = vmatprep.subr.mxu0 0.0
      %381 = vmatpush1.msra.mxu0 %v367
      %382 = vmatprep.subr.mxu0 0.0
      %383 = vmatpush1.msra.mxu0 %v368
      %384 = vmatprep.subr.mxu0 0.0
      %385 = vmatpush1.msra.mxu0 %v369
      %386 = vmatprep.subr.mxu0 0.0
      %387 = vmatpush1.msra.mxu0 %v370
      %388 = vmatprep.subr.mxu0 0.0
      %389 = vmatpush1.msra.mxu0 %v371
      %390 = vmatprep.subr.mxu0 0.0
      %391 = vmatpush1.msra.mxu0 %v372
      %392 = vmatprep.subr.mxu0 0.0
      %393 = vmatpush1.msra.mxu0 0.0
      %394 = vmatprep.subr.mxu0 0.0
      %395 = vmatpush1.msra.mxu0 0.0
      %396 = vmatprep.subr.mxu0 0.0
      %397 = vmatpush1.msra.mxu0 0.0
      %398 = vmatprep.subr.mxu0 0.0
      %399 = vmatpush1.msra.mxu0 0.0
      %400 = vmatprep.subr.mxu0 0.0
      %401 = vmatpush1.msra.mxu0 0.0
      %402 = vmatprep.subr.mxu0 0.0
      %403 = vmatpush1.msra.mxu0 0.0
      %404 = vmatprep.subr.mxu0 0.0
      %405 = vmatpush1.msra.mxu0 0.0
      %406 = vmatprep.subr.mxu0 0.0
      %407 = vmatpush1.msra.mxu0 0.0
      %408 = vmatprep.subr.mxu0 0.0
      %409 = vmatpush1.msra.mxu0 0.0
      %410 = vmatprep.subr.mxu0 0.0
      %411 = vmatpush1.msra.mxu0 0.0
      %412 = vmatprep.subr.mxu0 0.0
      %413 = vmatpush1.msra.mxu0 0.0
      %414 = vmatprep.subr.mxu0 0.0
      %415 = vmatpush1.msra.mxu0 0.0
      %416 = vmatprep.subr.mxu0 0.0
      %417 = vmatpush1.msra.mxu0 0.0
      %418 = vmatprep.subr.mxu0 0.0
      %419 = vmatpush1.msra.mxu0 0.0
      %420 = vmatprep.subr.mxu0 0.0
      %421 = vmatpush1.msra.mxu0 0.0
      %422 = vmatprep.subr.mxu0 0.0
      %423 = vmatpush1.msra.mxu0 0.0
      %424 = vmatprep.subr.mxu0 0.0
      %425 = vmatpush1.msra.mxu0 0.0
      %426 = vmatprep.subr.mxu0 0.0
      %427 = vmatpush1.msra.mxu0 0.0
      %428 = vmatprep.subr.mxu0 0.0
      %429 = vmatpush1.msra.mxu0 0.0
      %430 = vmatprep.subr.mxu0 0.0
      %431 = vmatpush1.msra.mxu0 0.0
      %432 = vmatprep.subr.mxu0 0.0
      %433 = vmatpush1.msra.mxu0 0.0
      %434 = vmatprep.subr.mxu0 0.0
      %435 = vmatpush1.msra.mxu0 0.0
      %436 = vmatprep.subr.mxu0 0.0
      %437 = vmatpush1.msra.mxu0 0.0
      %438 = vmatprep.subr.mxu0 0.0
      %439 = vmatpush1.msra.mxu0 0.0
      %440 = vmatprep.mubr.f32.mxu0 0.0
      %441 = vmatmul.mubr.f32.gmra.mrb[0].mxu0 %v374
      %v442 = vpop.f32.mrb[0].mxu0
      %v443 = vadd.f32 0.0, %v442
      %v444 = vpop.f32.mrb[0].mxu0
      %445 = vdwg.mxu0
      %v446 = vadd.f32 %v358, %v443
      %v447 = vld [vmem:[%s2] sm:$0x1]
      %v449 = vlaneseq
      %v450 = vshrl.u32 %v449, 7
      %v451 = vsub.s32 0, %v450
      %v452 = vrot.slane %v447, %v451
      %v454 = vadd.f32 %v446, %v452
      %v455 = vmax.f32 %v454, 0.0
      %456 = vst [vmem:[%s190] sm:$0xff] %v455
      %p457 = scmp.lt.s32.totalorder %s18, 1
      %s458 = scalar_select %p457, %s18, 1
      %p459 = scmp.lt.s32.totalorder %s19, 1
      %s460 = scalar_select %p459, %s19, 1
      %s461 = smul.addr %s458, 2
      %s462 = sadd.s32 %s460, %s461
      %s463 = smul.addr %s462, 8
      %s464 = scalar_lea.vmem %s3, %s463
      // Predicated region
      $region33: #{basic_conv.1} parent=31 // pred_check
        %p465 = pneg %p114
      $region34: #{basic_conv.1} parent=31 // pred_check_branch
        %467 = sbr.rel (%p465) target = $region36
      $region35: #{basic_conv.1} parent=31 // pred_region
        _
      $region36: #{basic_conv.1} parent=31 // pred_fallthru
        _
    $region32: #{basic_conv.1} parent=5 // pred_fallthru
      _
    %p468 = scmp.le.s32.totalorder 2, %s9
    // Predicated region
    $region37: #{basic_conv.1} parent=5 // pred_check
      %p469 = pneg %p468
    $region38: #{basic_conv.1} parent=5 // pred_check_branch
      %471 = sbr.rel (%p469) target = $region40
    $region39: #{basic_conv.1} parent=5 // pred_region
      %s472 = ssub.s32 %s9, 2
      // Predicated region
      $region41: #{basic_conv.1} parent=39 // pred_check
        %p473 = pneg %p120
      $region42: #{basic_conv.1} parent=39 // pred_check_branch
        %475 = sbr.rel (%p473) target = $region44
      $region43: #{basic_conv.1} parent=39 // pred_region
        %p476 = scmp.lt.s32.totalorder %s20, 1
        %s477 = scalar_select %p476, %s20, 1
        %p478 = scmp.lt.s32.totalorder %s21, 1
        %s479 = scalar_select %p478, %s21, 1
        %s480 = smul.addr %s477, 2
        %s481 = sadd.s32 %s479, %s480
        %s482 = smul.addr %s481, 8
        %s483 = scalar_lea.vmem %s3, %s482
      $region44: #{basic_conv.1} parent=39 // pred_fallthru
        _
    $region40: #{basic_conv.1} parent=5 // pred_fallthru
      _
  $region6: #{basic_conv.1} parent=0 // loop_footer
    %s13 = sadd.s32 1, %s9
  $region7: #{basic_conv.1} parent=0 // loop_footer_branch
    %8 = sbr.rel target = $region3
  $region8: #{basic_conv.1} parent=0 // loop_exit
    _

</llo_original>
